<compile_context>
chip_gen: v7x
topology: tpu7x:2x2x1
jax: 0.10.0
libtpu: 0.0.40
codegen_flags: <defaults>
</compile_context>

<pallas_src>
import jax
import jax.numpy as jnp
from jax.experimental import pallas as pl
from jax.experimental.pallas import tpu as pltpu


def _round_up(x, m):
    return ((x + m - 1) // m) * m


def _qfunc_kernel(obsT_ref, actT_ref, w1oT_ref, w1aT_ref, b1_ref,
                  w2T_ref, b2_ref, w3_ref, b3_ref, o_ref):
    # Layer 1: fused concat via split-W1 matmuls; batch on lanes, f32 MXU acc.
    h1 = (jnp.dot(w1oT_ref[...], obsT_ref[...], preferred_element_type=jnp.float32)
          + jnp.dot(w1aT_ref[...], actT_ref[...], preferred_element_type=jnp.float32)
          + b1_ref[...])                                  # (H1, tile_b)
    h1 = jnp.maximum(h1, 0.0)                             # ReLU

    # Layer 2.
    h2 = jnp.dot(w2T_ref[...], h1,
                 preferred_element_type=jnp.float32) + b2_ref[...]   # (H2, tile_b)
    h2 = jnp.maximum(h2, 0.0)                             # ReLU

    # Layer 3 (single output unit): plain (1, H2) @ (H2, tile_b) — the result is
    # already the lane-dense (1, tile_b) Q row, no relayout needed.
    q = jnp.dot(w3_ref[...], h2,
                preferred_element_type=jnp.float32) + b3_ref[...]    # (1, tile_b)
    o_ref[...] = q.astype(o_ref.dtype)


def prepare_params(params, obs_dim):
    """One-time conversion of math-layout params to the kernel's batch-on-lanes
    layout (hoisted out of the per-call wrapper)."""
    w1, b1, w2, b2, w3, b3 = params        # w: (in, out), b: (out,)
    return (
        jnp.asarray(w1[:obs_dim].T, jnp.float32),         # W1oT: (H1, obs_dim)
        jnp.asarray(w1[obs_dim:].T, jnp.float32),         # W1aT: (H1, act_dim)
        jnp.asarray(b1, jnp.float32).reshape(-1, 1),      # b1:   (H1, 1)
        jnp.asarray(w2.T, jnp.float32),                   # W2T:  (H2, H1)
        jnp.asarray(b2, jnp.float32).reshape(-1, 1),      # b2:   (H2, 1)
        jnp.asarray(w3, jnp.float32).reshape(1, -1),      # w3:   (1, H2)
        jnp.asarray(b3, jnp.float32).reshape(1, 1),       # b3:   (1, 1)
    )


def mlp_q_function(obs, act, kparams, *, tile_b_max=4096):
    """Pallas-backed Q(obs, act). `kparams` from prepare_params. Returns (batch,)."""
    w1oT, w1aT, b1, w2T, b2, w3_row, b3 = kparams
    B, obs_dim = obs.shape
    act_dim = act.shape[1]

    # Batch lives on the lane axis -> pad only to a multiple of 128 (skip the
    # pad copies entirely when B is already a multiple of 128).
    b_pad = _round_up(B, 128)
    obsT = obs.astype(jnp.float32).T                      # (obs_dim, B)
    actT = act.astype(jnp.float32).T                      # (act_dim, B)
    if b_pad != B:
        obsT = jnp.pad(obsT, ((0, 0), (0, b_pad - B)))
        actT = jnp.pad(actT, ((0, 0), (0, b_pad - B)))

    # Pick tile_b: a multiple of 128 dividing b_pad, as large as possible, but
    # keeping >= 2 grid steps when possible so v7x's two TensorCores both work.
    nb = b_pad // 128                                     # number of lane-chunks
    cap = min(max(tile_b_max // 128, 1), nb)
    if nb >= 2:
        cap = min(cap, max(1, nb // 2))
    chunks = max(d for d in range(1, cap + 1) if nb % d == 0)
    tile_b = chunks * 128
    grid = (b_pad // tile_b,)

    def resident(arr):
        # Same block every grid step -> weight stays resident in VMEM.
        return pl.BlockSpec(arr.shape, lambda i, _n=arr.ndim: (0,) * _n)

    q_row = pl.pallas_call(
        _qfunc_kernel,
        out_shape=jax.ShapeDtypeStruct((1, b_pad), jnp.float32),
        grid=grid,
        in_specs=[
            pl.BlockSpec((obs_dim, tile_b), lambda i: (0, i)),
            pl.BlockSpec((act_dim, tile_b), lambda i: (0, i)),
            resident(w1oT), resident(w1aT), resident(b1),
            resident(w2T), resident(b2),
            resident(w3_row), resident(b3),
        ],
        out_specs=pl.BlockSpec((1, tile_b), lambda i: (0, i)),
        compiler_params=pltpu.CompilerParams(
            dimension_semantics=("parallel",)),
    )(obsT, actT, w1oT, w1aT, b1, w2T, b2, w3_row, b3)

    return q_row[0, :B]  # drop lane padding; matches torch.squeeze(q, -1)


def init_params(key, obs_dim, act_dim, hidden_sizes):
    """Deterministic init mimicking nn.Linear's U(-1/sqrt(fan_in), 1/sqrt(fan_in)).
    Math layout: w (in, out), b (out,)."""
    sizes = [obs_dim + act_dim] + list(hidden_sizes) + [1]
    params = []
    for j in range(len(sizes) - 1):
        fan_in, fan_out = sizes[j], sizes[j + 1]
        key, kw, kb = jax.random.split(key, 3)
        bound = 1.0 / jnp.sqrt(jnp.float32(fan_in))
        w = jax.random.uniform(kw, (fan_in, fan_out), jnp.float32, -bound, bound)
        b = jax.random.uniform(kb, (fan_out,), jnp.float32, -bound, bound)
        params += [w, b]
    return tuple(params)


def _reference(obs, act, params):
    w1, b1, w2, b2, w3, b3 = params
    x = jnp.concatenate([obs, act], axis=-1)
    h1 = jnp.maximum(x @ w1 + b1, 0.0)
    h2 = jnp.maximum(h1 @ w2 + b2, 0.0)
    return jnp.squeeze(h2 @ w3 + b3, -1)


if __name__ == "__main__":
    # Small SAC-like shapes: batch=8, obs_dim=16, act_dim=8, hidden=(32, 32)
    batch, obs_dim, act_dim = 8, 16, 8
    hidden_sizes = (32, 32)

    key = jax.random.PRNGKey(0)
    k_obs, k_act, k_par = jax.random.split(key, 3)
    obs = jax.random.normal(k_obs, (batch, obs_dim), jnp.float32)
    act = jax.random.normal(k_act, (batch, act_dim), jnp.float32)
    params = init_params(k_par, obs_dim, act_dim, hidden_sizes)
    kparams = prepare_params(params, obs_dim)   # one-time kernel-layout params

    q = mlp_q_function(obs, act, kparams)
    jax.block_until_ready(q)
    q_ref = _reference(obs, act, params)
    assert q.shape == (batch,), q.shape
    assert jnp.allclose(q, q_ref, atol=1e-5, rtol=1e-5), (q, q_ref)

    # Pad-free, multi-step path (256 = 2 * 128 -> grid=(2,), no jnp.pad copies).
    k_obs1, k_act1 = jax.random.split(jax.random.PRNGKey(2))
    obs1 = jax.random.normal(k_obs1, (256, obs_dim), jnp.float32)
    act1 = jax.random.normal(k_act1, (256, act_dim), jnp.float32)
    q1 = mlp_q_function(obs1, act1, kparams)
    jax.block_until_ready(q1)
    assert q1.shape == (256,)
    assert jnp.allclose(q1, _reference(obs1, act1, params), atol=1e-4, rtol=1e-4)

    # Padded, multi-step path (1000 -> 1024 lanes, tile_b=512, grid=(2,)).
    big_b = 1000
    k_obs2, k_act2 = jax.random.split(jax.random.PRNGKey(1))
    obs2 = jax.random.normal(k_obs2, (big_b, obs_dim), jnp.float32)
    act2 = jax.random.normal(k_act2, (big_b, act_dim), jnp.float32)
    q2 = mlp_q_function(obs2, act2, kparams)
    jax.block_until_ready(q2)
    assert q2.shape == (big_b,), q2.shape
    assert jnp.allclose(q2, _reference(obs2, act2, params), atol=1e-4, rtol=1e-4)

    print("KERNEL_OK")
</pallas_src>

<mosaic_0001>
module attributes {stable_mosaic.version = 11 : i64} {
  func.func @_qfunc_kernel(%arg0: i32, %arg1: memref<16x128xf32, #tpu.memory_space<vmem>>, %arg2: memref<8x128xf32, #tpu.memory_space<vmem>>, %arg3: memref<32x16xf32, #tpu.memory_space<vmem>>, %arg4: memref<32x8xf32, #tpu.memory_space<vmem>>, %arg5: memref<32x1xf32, #tpu.memory_space<vmem>>, %arg6: memref<32x32xf32, #tpu.memory_space<vmem>>, %arg7: memref<32x1xf32, #tpu.memory_space<vmem>>, %arg8: memref<1x32xf32, #tpu.memory_space<vmem>>, %arg9: memref<1x1xf32, #tpu.memory_space<vmem>>, %arg10: memref<1x128xf32, #tpu.memory_space<vmem>>) attributes {dimension_semantics = [#tpu.dimension_semantics<parallel>], iteration_bounds = array<i64: 1>, scalar_prefetch = 0 : i64, scratch_operands = 0 : i64, tpu.core_type = #tpu.core_type<tc>, window_params = [{transform_indices = @transform_0, window_bounds = array<i64: 16, 128>}, {transform_indices = @transform_1, window_bounds = array<i64: 8, 128>}, {pipeline_mode = #tpu.pipeline_mode<synchronous>, transform_indices = @transform_2, window_bounds = array<i64: 32, 16>}, {pipeline_mode = #tpu.pipeline_mode<synchronous>, transform_indices = @transform_3, window_bounds = array<i64: 32, 8>}, {pipeline_mode = #tpu.pipeline_mode<synchronous>, transform_indices = @transform_4, window_bounds = array<i64: 32, 1>}, {pipeline_mode = #tpu.pipeline_mode<synchronous>, transform_indices = @transform_5, window_bounds = array<i64: 32, 32>}, {pipeline_mode = #tpu.pipeline_mode<synchronous>, transform_indices = @transform_6, window_bounds = array<i64: 32, 1>}, {pipeline_mode = #tpu.pipeline_mode<synchronous>, transform_indices = @transform_7, window_bounds = array<i64: 1, 32>}, {pipeline_mode = #tpu.pipeline_mode<synchronous>, transform_indices = @transform_8, window_bounds = array<i64: 1, 1>}, {transform_indices = @transform_9, window_bounds = array<i64: 1, 128>}]} {
    %c0 = arith.constant 0 : index
    %c0_0 = arith.constant 0 : index
    %0 = vector.load %arg3[%c0, %c0_0] : memref<32x16xf32, #tpu.memory_space<vmem>>, vector<32x16xf32>
    %c0_1 = arith.constant 0 : index
    %c0_2 = arith.constant 0 : index
    %1 = vector.load %arg1[%c0_1, %c0_2] : memref<16x128xf32, #tpu.memory_space<vmem>>, vector<16x128xf32>
    %cst = arith.constant dense<0.000000e+00> : vector<32x128xf32>
    %2 = tpu.matmul %0, %1, %cst {dimension_numbers = #tpu.dot_dimension_numbers<[1], [0], [0], [1], [0, 0, 1, 1], [], []>} : vector<32x16xf32>, vector<16x128xf32>, vector<32x128xf32> -> vector<32x128xf32>
    %c0_3 = arith.constant 0 : index
    %c0_4 = arith.constant 0 : index
    %3 = vector.load %arg4[%c0_3, %c0_4] : memref<32x8xf32, #tpu.memory_space<vmem>>, vector<32x8xf32>
    %c0_5 = arith.constant 0 : index
    %c0_6 = arith.constant 0 : index
    %4 = vector.load %arg2[%c0_5, %c0_6] : memref<8x128xf32, #tpu.memory_space<vmem>>, vector<8x128xf32>
    %cst_7 = arith.constant dense<0.000000e+00> : vector<32x128xf32>
    %5 = tpu.matmul %3, %4, %cst_7 {dimension_numbers = #tpu.dot_dimension_numbers<[1], [0], [0], [1], [0, 0, 1, 1], [], []>} : vector<32x8xf32>, vector<8x128xf32>, vector<32x128xf32> -> vector<32x128xf32>
    %6 = arith.addf %2, %5 : vector<32x128xf32>
    %c0_8 = arith.constant 0 : index
    %c0_9 = arith.constant 0 : index
    %7 = vector.load %arg5[%c0_8, %c0_9] : memref<32x1xf32, #tpu.memory_space<vmem>>, vector<32x1xf32>
    %8 = vector.broadcast %7 : vector<32x1xf32> to vector<32x128xf32>
    %9 = arith.addf %6, %8 : vector<32x128xf32>
    %cst_10 = arith.constant 0.000000e+00 : f32
    %10 = vector.broadcast %cst_10 : f32 to vector<32x128xf32>
    %11 = arith.maximumf %9, %10 : vector<32x128xf32>
    %c0_11 = arith.constant 0 : index
    %c0_12 = arith.constant 0 : index
    %12 = vector.load %arg6[%c0_11, %c0_12] : memref<32x32xf32, #tpu.memory_space<vmem>>, vector<32x32xf32>
    %cst_13 = arith.constant dense<0.000000e+00> : vector<32x128xf32>
    %13 = tpu.matmul %12, %11, %cst_13 {dimension_numbers = #tpu.dot_dimension_numbers<[1], [0], [0], [1], [0, 0, 1, 1], [], []>} : vector<32x32xf32>, vector<32x128xf32>, vector<32x128xf32> -> vector<32x128xf32>
    %c0_14 = arith.constant 0 : index
    %c0_15 = arith.constant 0 : index
    %14 = vector.load %arg7[%c0_14, %c0_15] : memref<32x1xf32, #tpu.memory_space<vmem>>, vector<32x1xf32>
    %15 = vector.broadcast %14 : vector<32x1xf32> to vector<32x128xf32>
    %16 = arith.addf %13, %15 : vector<32x128xf32>
    %cst_16 = arith.constant 0.000000e+00 : f32
    %17 = vector.broadcast %cst_16 : f32 to vector<32x128xf32>
    %18 = arith.maximumf %16, %17 : vector<32x128xf32>
    %c0_17 = arith.constant 0 : index
    %c0_18 = arith.constant 0 : index
    %19 = vector.load %arg8[%c0_17, %c0_18] : memref<1x32xf32, #tpu.memory_space<vmem>>, vector<1x32xf32>
    %cst_19 = arith.constant dense<0.000000e+00> : vector<1x128xf32>
    %20 = tpu.matmul %19, %18, %cst_19 {dimension_numbers = #tpu.dot_dimension_numbers<[1], [0], [0], [1], [0, 0, 1, 1], [], []>} : vector<1x32xf32>, vector<32x128xf32>, vector<1x128xf32> -> vector<1x128xf32>
    %c0_20 = arith.constant 0 : index
    %c0_21 = arith.constant 0 : index
    %21 = vector.load %arg9[%c0_20, %c0_21] : memref<1x1xf32, #tpu.memory_space<vmem>>, vector<1x1xf32>
    %22 = vector.broadcast %21 : vector<1x1xf32> to vector<1x128xf32>
    %23 = arith.addf %20, %22 : vector<1x128xf32>
    %c0_22 = arith.constant 0 : index
    %c0_23 = arith.constant 0 : index
    %24 = vector.load %arg10[%c0_22, %c0_23] : memref<1x128xf32, #tpu.memory_space<vmem>>, vector<1x128xf32>
    tpu.vector_store %arg10[%c0_22, %c0_23], %23 {strides = array<i32>} : memref<1x128xf32, #tpu.memory_space<vmem>>, vector<1x128xf32>,
    return
  }
  func.func @transform_0(%arg0: i32) -> (i32, i32) {
    %c0_i32 = arith.constant 0 : i32
    %c0_i32_0 = arith.constant 0 : i32
    return %c0_i32, %arg0 : i32, i32
  }
  func.func @transform_1(%arg0: i32) -> (i32, i32) {
    %c0_i32 = arith.constant 0 : i32
    %c0_i32_0 = arith.constant 0 : i32
    return %c0_i32, %arg0 : i32, i32
  }
  func.func @transform_2(%arg0: i32) -> (i32, i32) {
    %c0_i32 = arith.constant 0 : i32
    %c0_i32_0 = arith.constant 0 : i32
    %c0_i32_1 = arith.constant 0 : i32
    return %c0_i32, %c0_i32_0 : i32, i32
  }
  func.func @transform_3(%arg0: i32) -> (i32, i32) {
    %c0_i32 = arith.constant 0 : i32
    %c0_i32_0 = arith.constant 0 : i32
    %c0_i32_1 = arith.constant 0 : i32
    return %c0_i32, %c0_i32_0 : i32, i32
  }
  func.func @transform_4(%arg0: i32) -> (i32, i32) {
    %c0_i32 = arith.constant 0 : i32
    %c0_i32_0 = arith.constant 0 : i32
    %c0_i32_1 = arith.constant 0 : i32
    return %c0_i32, %c0_i32_0 : i32, i32
  }
  func.func @transform_5(%arg0: i32) -> (i32, i32) {
    %c0_i32 = arith.constant 0 : i32
    %c0_i32_0 = arith.constant 0 : i32
    %c0_i32_1 = arith.constant 0 : i32
    return %c0_i32, %c0_i32_0 : i32, i32
  }
  func.func @transform_6(%arg0: i32) -> (i32, i32) {
    %c0_i32 = arith.constant 0 : i32
    %c0_i32_0 = arith.constant 0 : i32
    %c0_i32_1 = arith.constant 0 : i32
    return %c0_i32, %c0_i32_0 : i32, i32
  }
  func.func @transform_7(%arg0: i32) -> (i32, i32) {
    %c0_i32 = arith.constant 0 : i32
    %c0_i32_0 = arith.constant 0 : i32
    %c0_i32_1 = arith.constant 0 : i32
    return %c0_i32, %c0_i32_0 : i32, i32
  }
  func.func @transform_8(%arg0: i32) -> (i32, i32) {
    %c0_i32 = arith.constant 0 : i32
    %c0_i32_0 = arith.constant 0 : i32
    %c0_i32_1 = arith.constant 0 : i32
    return %c0_i32, %c0_i32_0 : i32, i32
  }
  func.func @transform_9(%arg0: i32) -> (i32, i32) {
    %c0_i32 = arith.constant 0 : i32
    %c0_i32_0 = arith.constant 0 : i32
    return %c0_i32, %arg0 : i32, i32
  }
}

</mosaic_0001>

<llo_original>
// kernel: tpu_custom_call.1
$region0: #{tpu_custom_call.1}
  #allocation0 [shape = 'u32[]', space=smem, size = 0x4, offset = 0x4, fixed_abs, tag = 'smem constant byte address 0x4 - core index']
  #allocation1 [shape = 'u32[144,128]{1,0:T(1,128)}', space=vmem, size = 0x12000, scoped, tag = 'internal scratch']
  #allocation2 [shape = 'f32[1,1]{1,0:T(1,128)S(1)}', space=vmem, size = 0x200, scoped, tag = 'scoped memory for tpu_custom_call.1']
  %s0 = inlined_call_operand.vmem [shape: f32[16,128], index: 0, kind: input, shape index: {}]
  %s1 = inlined_call_operand.vmem [shape: f32[8,128], index: 1, kind: input, shape index: {}]
  %s2 = inlined_call_operand.vmem [shape: f32[32,16], index: 2, kind: input, shape index: {}]
  %s3 = inlined_call_operand.vmem [shape: f32[32,8], index: 3, kind: input, shape index: {}]
  %s4 = inlined_call_operand.vmem [shape: f32[32,1], index: 4, kind: input, shape index: {}]
  %s5 = inlined_call_operand.vmem [shape: f32[32,32], index: 5, kind: input, shape index: {}]
  %s6 = inlined_call_operand.vmem [shape: f32[32,1], index: 6, kind: input, shape index: {}]
  %s7 = inlined_call_operand.vmem [shape: f32[1,32], index: 7, kind: input, shape index: {}]
  %s8 = inlined_call_operand.<no memory space> [shape: f32[1,1], index: 8, kind: input, shape index: {}]
  %s9 = inlined_call_operand.hbm [shape: f32[1,128], index: 9, kind: output, shape index: {}]
  %s10 = sld [smem:[#allocation0]]
  $region46: #{tpu_custom_call.1} parent=0
    _
  %s12 = ssub.s32 1, %s10
  %s13 = scalar_select 0, %s12, %s10
  %v14 = vstv %s8
  %15 = vst [vmem:[#allocation2] sm:$0x1] %v14
  $region1: #{tpu_custom_call.1} parent=0
    #allocation3 [shape = 'u8[512]{0}', space=vmem, size = 0x400, scoped, tag = 'output window, operand 0, single buffered']
    #allocation4 [shape = 's32[1]{0}', space=sflag, size = 0x4, scoped, tag = 'scoped memory for tpu_custom_call.1']
    %16 = vsyncpa [#allocation4], 0
    // Predicated region
    $region2: #{tpu_custom_call.1} parent=1 // pred_check
      _
    $region3: #{tpu_custom_call.1} parent=1 // pred_check_branch
      %18 = sbr.rel (0) target = $region5
    $region4: #{tpu_custom_call.1} parent=1 // pred_region
      _
    $region5: #{tpu_custom_call.1} parent=1 // pred_fallthru
      _
    // Predicated region
    $region6: #{tpu_custom_call.1} parent=1 // pred_check
      _
    $region7: #{tpu_custom_call.1} parent=1 // pred_check_branch
      %20 = sbr.rel (0) target = $region9
    $region8: #{tpu_custom_call.1} parent=1 // pred_region
      _
    $region9: #{tpu_custom_call.1} parent=1 // pred_fallthru
      _
    // Predicated region
    $region10: #{tpu_custom_call.1} parent=1 // pred_check
      _
    $region11: #{tpu_custom_call.1} parent=1 // pred_check_branch
      %22 = sbr.rel (0) target = $region13
    $region12: #{tpu_custom_call.1} parent=1 // pred_region
      _
    $region13: #{tpu_custom_call.1} parent=1 // pred_fallthru
      _
    // Predicated region
    $region14: #{tpu_custom_call.1} parent=1 // pred_check
      _
    $region15: #{tpu_custom_call.1} parent=1 // pred_check_branch
      %24 = sbr.rel (0) target = $region17
    $region16: #{tpu_custom_call.1} parent=1 // pred_region
      _
    $region17: #{tpu_custom_call.1} parent=1 // pred_fallthru
      _
    // Predicated region
    $region18: #{tpu_custom_call.1} parent=1 // pred_check
      _
    $region19: #{tpu_custom_call.1} parent=1 // pred_check_branch
      %26 = sbr.rel (0) target = $region21
    $region20: #{tpu_custom_call.1} parent=1 // pred_region
      _
    $region21: #{tpu_custom_call.1} parent=1 // pred_fallthru
      _
    // Predicated region
    $region22: #{tpu_custom_call.1} parent=1 // pred_check
      _
    $region23: #{tpu_custom_call.1} parent=1 // pred_check_branch
      %28 = sbr.rel (0) target = $region25
    $region24: #{tpu_custom_call.1} parent=1 // pred_region
      _
    $region25: #{tpu_custom_call.1} parent=1 // pred_fallthru
      _
    // Predicated region
    $region26: #{tpu_custom_call.1} parent=1 // pred_check
      _
    $region27: #{tpu_custom_call.1} parent=1 // pred_check_branch
      %30 = sbr.rel (0) target = $region29
    $region28: #{tpu_custom_call.1} parent=1 // pred_region
      _
    $region29: #{tpu_custom_call.1} parent=1 // pred_fallthru
      _
    // Predicated region
    $region30: #{tpu_custom_call.1} parent=1 // pred_check
      _
    $region31: #{tpu_custom_call.1} parent=1 // pred_check_branch
      %32 = sbr.rel (0) target = $region33
    $region32: #{tpu_custom_call.1} parent=1 // pred_region
      _
    $region33: #{tpu_custom_call.1} parent=1 // pred_fallthru
      _
    // Predicated region
    $region34: #{tpu_custom_call.1} parent=1 // pred_check
      _
    $region35: #{tpu_custom_call.1} parent=1 // pred_check_branch
      %34 = sbr.rel (0) target = $region37
    $region36: #{tpu_custom_call.1} parent=1 // pred_region
      _
    $region37: #{tpu_custom_call.1} parent=1 // pred_fallthru
      _
    %v35 = vld [vmem:[%s2] sm:$0xff]
    %v36 = vld [vmem:[%s2 + $0x8] sm:$0xff]
    %v37 = vld [vmem:[%s2 + $0x10] sm:$0xff]
    %v38 = vld [vmem:[%s2 + $0x18] sm:$0xff]
    %v39 = vld [vmem:[%s0] sm:$0xff]
    %v40 = vld [vmem:[%s0 + $0x8] sm:$0xff]
    %v41 = vld [vmem:[%s3] sm:$0xff]
    %v42 = vld [vmem:[%s3 + $0x8] sm:$0xff]
    %v43 = vld [vmem:[%s3 + $0x10] sm:$0xff]
    %v44 = vld [vmem:[%s3 + $0x18] sm:$0xff]
    %v45 = vld [vmem:[%s1] sm:$0xff]
    %vm46 = vcmask 64512
    %v48 = vsel %vm46, %v41, 0
    %v51 = vsel %vm46, %v42, 0
    %v54 = vsel %vm46, %v43, 0
    %v57 = vsel %vm46, %v44, 0
    %59 = vmatprep.subr.mxu0 0.0
    %60 = vmatpush1.msra.mxu0 %v45
    %61 = vmatprep.subr.mxu0 0.0
    %62 = vmatpush1.msra.mxu0 0.0
    %63 = vmatprep.subr.mxu0 0.0
    %64 = vmatpush1.msra.mxu0 0.0
    %65 = vmatprep.subr.mxu0 0.0
    %66 = vmatpush1.msra.mxu0 0.0
    %67 = vmatprep.subr.mxu0 0.0
    %68 = vmatpush1.msra.mxu0 0.0
    %69 = vmatprep.subr.mxu0 0.0
    %70 = vmatpush1.msra.mxu0 0.0
    %71 = vmatprep.subr.mxu0 0.0
    %72 = vmatpush1.msra.mxu0 0.0
    %73 = vmatprep.subr.mxu0 0.0
    %74 = vmatpush1.msra.mxu0 0.0
    %75 = vmatprep.subr.mxu0 0.0
    %76 = vmatpush1.msra.mxu0 0.0
    %77 = vmatprep.subr.mxu0 0.0
    %78 = vmatpush1.msra.mxu0 0.0
    %79 = vmatprep.subr.mxu0 0.0
    %80 = vmatpush1.msra.mxu0 0.0
    %81 = vmatprep.subr.mxu0 0.0
    %82 = vmatpush1.msra.mxu0 0.0
    %83 = vmatprep.subr.mxu0 0.0
    %84 = vmatpush1.msra.mxu0 0.0
    %85 = vmatprep.subr.mxu0 0.0
    %86 = vmatpush1.msra.mxu0 0.0
    %87 = vmatprep.subr.mxu0 0.0
    %88 = vmatpush1.msra.mxu0 0.0
    %89 = vmatprep.subr.mxu0 0.0
    %90 = vmatpush1.msra.mxu0 0.0
    %91 = vmatprep.subr.mxu0 0.0
    %92 = vmatpush1.msra.mxu0 0.0
    %93 = vmatprep.subr.mxu0 0.0
    %94 = vmatpush1.msra.mxu0 0.0
    %95 = vmatprep.subr.mxu0 0.0
    %96 = vmatpush1.msra.mxu0 0.0
    %97 = vmatprep.subr.mxu0 0.0
    %98 = vmatpush1.msra.mxu0 0.0
    %99 = vmatprep.subr.mxu0 0.0
    %100 = vmatpush1.msra.mxu0 0.0
    %101 = vmatprep.subr.mxu0 0.0
    %102 = vmatpush1.msra.mxu0 0.0
    %103 = vmatprep.subr.mxu0 0.0
    %104 = vmatpush1.msra.mxu0 0.0
    %105 = vmatprep.subr.mxu0 0.0
    %106 = vmatpush1.msra.mxu0 0.0
    %107 = vmatprep.subr.mxu0 0.0
    %108 = vmatpush1.msra.mxu0 0.0
    %109 = vmatprep.subr.mxu0 0.0
    %110 = vmatpush1.msra.mxu0 0.0
    %111 = vmatprep.subr.mxu0 0.0
    %112 = vmatpush1.msra.mxu0 0.0
    %113 = vmatprep.subr.mxu0 0.0
    %114 = vmatpush1.msra.mxu0 0.0
    %115 = vmatprep.subr.mxu0 0.0
    %116 = vmatpush1.msra.mxu0 0.0
    %117 = vmatprep.subr.mxu0 0.0
    %118 = vmatpush1.msra.mxu0 0.0
    %119 = vmatprep.subr.mxu0 0.0
    %120 = vmatpush1.msra.mxu0 0.0
    %121 = vmatprep.subr.mxu0 0.0
    %122 = vmatpush1.msra.mxu0 0.0
    %123 = vmatprep.mubr.f32.mxu0 0.0
    %124 = vmatmul.mubr.f32.gmra.mrb[0].mxu0 %v48
    %v125 = vpop.f32.mrb[0].mxu0
    %v126 = vadd.f32 0.0, %v125
    %v127 = vpop.f32.mrb[0].mxu0
    %128 = vmatprep.mubr.f32.mxu0 0.0
    %129 = vmatmul.mubr.f32.gmra.mrb[0].mxu0 %v51
    %v130 = vpop.f32.mrb[0].mxu0
    %v131 = vadd.f32 0.0, %v130
    %v132 = vpop.f32.mrb[0].mxu0
    %133 = vmatprep.mubr.f32.mxu0 0.0
    %134 = vmatmul.mubr.f32.gmra.mrb[0].mxu0 %v54
    %v135 = vpop.f32.mrb[0].mxu0
    %v136 = vadd.f32 0.0, %v135
    %v137 = vpop.f32.mrb[0].mxu0
    %138 = vmatprep.mubr.f32.mxu0 0.0
    %139 = vmatmul.mubr.f32.gmra.mrb[0].mxu0 %v57
    %v140 = vpop.f32.mrb[0].mxu0
    %v141 = vadd.f32 0.0, %v140
    %v142 = vpop.f32.mrb[0].mxu0
    %143 = vdwg.mxu0
    %vm144 = vcmask 130048
    %v146 = vsel %vm144, %v35, 0
    %v149 = vsel %vm144, %v36, 0
    %v152 = vsel %vm144, %v37, 0
    %v155 = vsel %vm144, %v38, 0
    %157 = vmatprep.subr.mxu0 0.0
    %158 = vmatpush1.msra.mxu0 %v39
    %159 = vmatprep.subr.mxu0 0.0
    %160 = vmatpush1.msra.mxu0 %v40
    %161 = vmatprep.subr.mxu0 0.0
    %162 = vmatpush1.msra.mxu0 0.0
    %163 = vmatprep.subr.mxu0 0.0
    %164 = vmatpush1.msra.mxu0 0.0
    %165 = vmatprep.subr.mxu0 0.0
    %166 = vmatpush1.msra.mxu0 0.0
    %167 = vmatprep.subr.mxu0 0.0
    %168 = vmatpush1.msra.mxu0 0.0
    %169 = vmatprep.subr.mxu0 0.0
    %170 = vmatpush1.msra.mxu0 0.0
    %171 = vmatprep.subr.mxu0 0.0
    %172 = vmatpush1.msra.mxu0 0.0
    %173 = vmatprep.subr.mxu0 0.0
    %174 = vmatpush1.msra.mxu0 0.0
    %175 = vmatprep.subr.mxu0 0.0
    %176 = vmatpush1.msra.mxu0 0.0
    %177 = vmatprep.subr.mxu0 0.0
    %178 = vmatpush1.msra.mxu0 0.0
    %179 = vmatprep.subr.mxu0 0.0
    %180 = vmatpush1.msra.mxu0 0.0
    %181 = vmatprep.subr.mxu0 0.0
    %182 = vmatpush1.msra.mxu0 0.0
    %183 = vmatprep.subr.mxu0 0.0
    %184 = vmatpush1.msra.mxu0 0.0
    %185 = vmatprep.subr.mxu0 0.0
    %186 = vmatpush1.msra.mxu0 0.0
    %187 = vmatprep.subr.mxu0 0.0
    %188 = vmatpush1.msra.mxu0 0.0
    %189 = vmatprep.subr.mxu0 0.0
    %190 = vmatpush1.msra.mxu0 0.0
    %191 = vmatprep.subr.mxu0 0.0
    %192 = vmatpush1.msra.mxu0 0.0
    %193 = vmatprep.subr.mxu0 0.0
    %194 = vmatpush1.msra.mxu0 0.0
    %195 = vmatprep.subr.mxu0 0.0
    %196 = vmatpush1.msra.mxu0 0.0
    %197 = vmatprep.subr.mxu0 0.0
    %198 = vmatpush1.msra.mxu0 0.0
    %199 = vmatprep.subr.mxu0 0.0
    %200 = vmatpush1.msra.mxu0 0.0
    %201 = vmatprep.subr.mxu0 0.0
    %202 = vmatpush1.msra.mxu0 0.0
    %203 = vmatprep.subr.mxu0 0.0
    %204 = vmatpush1.msra.mxu0 0.0
    %205 = vmatprep.subr.mxu0 0.0
    %206 = vmatpush1.msra.mxu0 0.0
    %207 = vmatprep.subr.mxu0 0.0
    %208 = vmatpush1.msra.mxu0 0.0
    %209 = vmatprep.subr.mxu0 0.0
    %210 = vmatpush1.msra.mxu0 0.0
    %211 = vmatprep.subr.mxu0 0.0
    %212 = vmatpush1.msra.mxu0 0.0
    %213 = vmatprep.subr.mxu0 0.0
    %214 = vmatpush1.msra.mxu0 0.0
    %215 = vmatprep.subr.mxu0 0.0
    %216 = vmatpush1.msra.mxu0 0.0
    %217 = vmatprep.subr.mxu0 0.0
    %218 = vmatpush1.msra.mxu0 0.0
    %219 = vmatprep.subr.mxu0 0.0
    %220 = vmatpush1.msra.mxu0 0.0
    %221 = vmatprep.mubr.f32.mxu0 0.0
    %222 = vmatmul.mubr.f32.gmra.mrb[0].mxu0 %v146
    %v223 = vpop.f32.mrb[0].mxu0
    %v224 = vadd.f32 %v126, %v223
    %v225 = vpop.f32.mrb[0].mxu0
    %226 = vmatprep.mubr.f32.mxu0 0.0
    %227 = vmatmul.mubr.f32.gmra.mrb[0].mxu0 %v149
    %v228 = vpop.f32.mrb[0].mxu0
    %v229 = vadd.f32 %v131, %v228
    %v230 = vpop.f32.mrb[0].mxu0
    %231 = vmatprep.mubr.f32.mxu0 0.0
    %232 = vmatmul.mubr.f32.gmra.mrb[0].mxu0 %v152
    %v233 = vpop.f32.mrb[0].mxu0
    %v234 = vadd.f32 %v136, %v233
    %v235 = vpop.f32.mrb[0].mxu0
    %236 = vmatprep.mubr.f32.mxu0 0.0
    %237 = vmatmul.mubr.f32.gmra.mrb[0].mxu0 %v155
    %v238 = vpop.f32.mrb[0].mxu0
    %v239 = vadd.f32 %v141, %v238
    %v240 = vpop.f32.mrb[0].mxu0
    %241 = vdwg.mxu0
    %v242 = vld [vmem:[%s4] sm:$0xff]
    %v243 = vld [vmem:[%s4 + $0x8] sm:$0xff]
    %v244 = vld [vmem:[%s4 + $0x10] sm:$0xff]
    %v245 = vld [vmem:[%s4 + $0x18] sm:$0xff]
    %247 = vset.pattern.permute.xlu0 0
    %248 = vperm.xlu0 %247, %v242
    %v249 = vpop.permute.xlu0 %248
    %252 = vset.pattern.permute.xlu0 0
    %253 = vperm.xlu0 %252, %v243
    %v254 = vpop.permute.xlu0 %253
    %257 = vset.pattern.permute.xlu0 0
    %258 = vperm.xlu0 %257, %v244
    %v259 = vpop.permute.xlu0 %258
    %262 = vset.pattern.permute.xlu0 0
    %263 = vperm.xlu0 %262, %v245
    %v264 = vpop.permute.xlu0 %263
    %v266 = vadd.f32 %v224, %v249
    %v267 = vadd.f32 %v229, %v254
    %v268 = vadd.f32 %v234, %v259
    %v269 = vadd.f32 %v239, %v264
    %v270 = vmax.f32 %v266, 0.0
    %v271 = vmax.f32 %v267, 0.0
    %v272 = vmax.f32 %v268, 0.0
    %v273 = vmax.f32 %v269, 0.0
    %v274 = vld [vmem:[%s5] sm:$0xff]
    %v275 = vld [vmem:[%s5 + $0x8] sm:$0xff]
    %v276 = vld [vmem:[%s5 + $0x10] sm:$0xff]
    %v277 = vld [vmem:[%s5 + $0x18] sm:$0xff]
    %v278 = vld [vmem:[%s6] sm:$0xff]
    %v279 = vld [vmem:[%s6 + $0x8] sm:$0xff]
    %v280 = vld [vmem:[%s6 + $0x10] sm:$0xff]
    %v281 = vld [vmem:[%s6 + $0x18] sm:$0xff]
    %283 = vset.pattern.permute.xlu0 0
    %284 = vperm.xlu0 %283, %v278
    %v285 = vpop.permute.xlu0 %284
    %288 = vset.pattern.permute.xlu0 0
    %289 = vperm.xlu0 %288, %v279
    %v290 = vpop.permute.xlu0 %289
    %293 = vset.pattern.permute.xlu0 0
    %294 = vperm.xlu0 %293, %v280
    %v295 = vpop.permute.xlu0 %294
    %298 = vset.pattern.permute.xlu0 0
    %299 = vperm.xlu0 %298, %v281
    %v300 = vpop.permute.xlu0 %299
    %vm302 = vcmask 261120
    %v304 = vsel %vm302, %v274, 0
    %v307 = vsel %vm302, %v275, 0
    %v310 = vsel %vm302, %v276, 0
    %v313 = vsel %vm302, %v277, 0
    %315 = vmatprep.subr.mxu0 0.0
    %316 = vmatpush1.msra.mxu0 %v270
    %317 = vmatprep.subr.mxu0 0.0
    %318 = vmatpush1.msra.mxu0 %v271
    %319 = vmatprep.subr.mxu0 0.0
    %320 = vmatpush1.msra.mxu0 %v272
    %321 = vmatprep.subr.mxu0 0.0
    %322 = vmatpush1.msra.mxu0 %v273
    %323 = vmatprep.subr.mxu0 0.0
    %324 = vmatpush1.msra.mxu0 0.0
    %325 = vmatprep.subr.mxu0 0.0
    %326 = vmatpush1.msra.mxu0 0.0
    %327 = vmatprep.subr.mxu0 0.0
    %328 = vmatpush1.msra.mxu0 0.0
    %329 = vmatprep.subr.mxu0 0.0
    %330 = vmatpush1.msra.mxu0 0.0
    %331 = vmatprep.subr.mxu0 0.0
    %332 = vmatpush1.msra.mxu0 0.0
    %333 = vmatprep.subr.mxu0 0.0
    %334 = vmatpush1.msra.mxu0 0.0
    %335 = vmatprep.subr.mxu0 0.0
    %336 = vmatpush1.msra.mxu0 0.0
    %337 = vmatprep.subr.mxu0 0.0
    %338 = vmatpush1.msra.mxu0 0.0
    %339 = vmatprep.subr.mxu0 0.0
    %340 = vmatpush1.msra.mxu0 0.0
    %341 = vmatprep.subr.mxu0 0.0
    %342 = vmatpush1.msra.mxu0 0.0
    %343 = vmatprep.subr.mxu0 0.0
    %344 = vmatpush1.msra.mxu0 0.0
    %345 = vmatprep.subr.mxu0 0.0
    %346 = vmatpush1.msra.mxu0 0.0
    %347 = vmatprep.subr.mxu0 0.0
    %348 = vmatpush1.msra.mxu0 0.0
    %349 = vmatprep.subr.mxu0 0.0
    %350 = vmatpush1.msra.mxu0 0.0
    %351 = vmatprep.subr.mxu0 0.0
    %352 = vmatpush1.msra.mxu0 0.0
    %353 = vmatprep.subr.mxu0 0.0
    %354 = vmatpush1.msra.mxu0 0.0
    %355 = vmatprep.subr.mxu0 0.0
    %356 = vmatpush1.msra.mxu0 0.0
    %357 = vmatprep.subr.mxu0 0.0
    %358 = vmatpush1.msra.mxu0 0.0
    %359 = vmatprep.subr.mxu0 0.0
    %360 = vmatpush1.msra.mxu0 0.0
    %361 = vmatprep.subr.mxu0 0.0
    %362 = vmatpush1.msra.mxu0 0.0
    %363 = vmatprep.subr.mxu0 0.0
    %364 = vmatpush1.msra.mxu0 0.0
    %365 = vmatprep.subr.mxu0 0.0
    %366 = vmatpush1.msra.mxu0 0.0
    %367 = vmatprep.subr.mxu0 0.0
    %368 = vmatpush1.msra.mxu0 0.0
    %369 = vmatprep.subr.mxu0 0.0
    %370 = vmatpush1.msra.mxu0 0.0
    %371 = vmatprep.subr.mxu0 0.0
    %372 = vmatpush1.msra.mxu0 0.0
    %373 = vmatprep.subr.mxu0 0.0
    %374 = vmatpush1.msra.mxu0 0.0
    %375 = vmatprep.subr.mxu0 0.0
    %376 = vmatpush1.msra.mxu0 0.0
    %377 = vmatprep.subr.mxu0 0.0
    %378 = vmatpush1.msra.mxu0 0.0
    %379 = vmatprep.mubr.f32.mxu0 0.0
    %380 = vmatmul.mubr.f32.gmra.mrb[0].mxu0 %v304
    %v381 = vpop.f32.mrb[0].mxu0
    %v382 = vadd.f32 %v285, %v381
    %v383 = vpop.f32.mrb[0].mxu0
    %384 = vmatprep.mubr.f32.mxu0 0.0
    %385 = vmatmul.mubr.f32.gmra.mrb[0].mxu0 %v307
    %v386 = vpop.f32.mrb[0].mxu0
    %v387 = vadd.f32 %v290, %v386
    %v388 = vpop.f32.mrb[0].mxu0
    %389 = vmatprep.mubr.f32.mxu0 0.0
    %390 = vmatmul.mubr.f32.gmra.mrb[0].mxu0 %v310
    %v391 = vpop.f32.mrb[0].mxu0
    %v392 = vadd.f32 %v295, %v391
    %v393 = vpop.f32.mrb[0].mxu0
    %394 = vmatprep.mubr.f32.mxu0 0.0
    %395 = vmatmul.mubr.f32.gmra.mrb[0].mxu0 %v313
    %v396 = vpop.f32.mrb[0].mxu0
    %v397 = vadd.f32 %v300, %v396
    %v398 = vpop.f32.mrb[0].mxu0
    %399 = vdwg.mxu0
    %v400 = vmax.f32 %v382, 0.0
    %v401 = vmax.f32 %v387, 0.0
    %v402 = vmax.f32 %v392, 0.0
    %v403 = vmax.f32 %v397, 0.0
    %v404 = vld [vmem:[%s7] sm:$0x1]
    %v405 = vld [vmem:[#allocation2] sm:$0x1]
    %407 = vset.pattern.permute.xlu0 0
    %408 = vperm.xlu0 %407, %v405
    %v409 = vpop.permute.xlu0 %408
    %v411 = vlaneseq
    %v412 = vshrl.u32 %v411, 7
    %v413 = vsub.s32 0, %v412
    %v414 = vrot.slane %v409, %v413
    %v416 = vsel %vm302, %v404, 0
    %418 = vmatprep.subr.mxu0 0.0
    %419 = vmatpush1.msra.mxu0 %v400
    %420 = vmatprep.subr.mxu0 0.0
    %421 = vmatpush1.msra.mxu0 %v401
    %422 = vmatprep.subr.mxu0 0.0
    %423 = vmatpush1.msra.mxu0 %v402
    %424 = vmatprep.subr.mxu0 0.0
    %425 = vmatpush1.msra.mxu0 %v403
    %426 = vmatprep.subr.mxu0 0.0
    %427 = vmatpush1.msra.mxu0 0.0
    %428 = vmatprep.subr.mxu0 0.0
    %429 = vmatpush1.msra.mxu0 0.0
    %430 = vmatprep.subr.mxu0 0.0
    %431 = vmatpush1.msra.mxu0 0.0
    %432 = vmatprep.subr.mxu0 0.0
    %433 = vmatpush1.msra.mxu0 0.0
    %434 = vmatprep.subr.mxu0 0.0
    %435 = vmatpush1.msra.mxu0 0.0
    %436 = vmatprep.subr.mxu0 0.0
    %437 = vmatpush1.msra.mxu0 0.0
    %438 = vmatprep.subr.mxu0 0.0
    %439 = vmatpush1.msra.mxu0 0.0
    %440 = vmatprep.subr.mxu0 0.0
    %441 = vmatpush1.msra.mxu0 0.0
    %442 = vmatprep.subr.mxu0 0.0
    %443 = vmatpush1.msra.mxu0 0.0
    %444 = vmatprep.subr.mxu0 0.0
    %445 = vmatpush1.msra.mxu0 0.0
    %446 = vmatprep.subr.mxu0 0.0
    %447 = vmatpush1.msra.mxu0 0.0
    %448 = vmatprep.subr.mxu0 0.0
    %449 = vmatpush1.msra.mxu0 0.0
    %450 = vmatprep.subr.mxu0 0.0
    %451 = vmatpush1.msra.mxu0 0.0
    %452 = vmatprep.subr.mxu0 0.0
    %453 = vmatpush1.msra.mxu0 0.0
    %454 = vmatprep.subr.mxu0 0.0
    %455 = vmatpush1.msra.mxu0 0.0
    %456 = vmatprep.subr.mxu0 0.0
    %457 = vmatpush1.msra.mxu0 0.0
    %458 = vmatprep.subr.mxu0 0.0
    %459 = vmatpush1.msra.mxu0 0.0
    %460 = vmatprep.subr.mxu0 0.0
    %461 = vmatpush1.msra.mxu0 0.0
    %462 = vmatprep.subr.mxu0 0.0
    %463 = vmatpush1.msra.mxu0 0.0
    %464 = vmatprep.subr.mxu0 0.0
    %465 = vmatpush1.msra.mxu0 0.0
    %466 = vmatprep.subr.mxu0 0.0
    %467 = vmatpush1.msra.mxu0 0.0
    %468 = vmatprep.subr.mxu0 0.0
    %469 = vmatpush1.msra.mxu0 0.0
    %470 = vmatprep.subr.mxu0 0.0
    %471 = vmatpush1.msra.mxu0 0.0
    %472 = vmatprep.subr.mxu0 0.0
    %473 = vmatpush1.msra.mxu0 0.0
    %474 = vmatprep.subr.mxu0 0.0
    %475 = vmatpush1.msra.mxu0 0.0
    %476 = vmatprep.subr.mxu0 0.0
    %477 = vmatpush1.msra.mxu0 0.0
    %478 = vmatprep.subr.mxu0 0.0
    %479 = vmatpush1.msra.mxu0 0.0
    %480 = vmatprep.subr.mxu0 0.0
    %481 = vmatpush1.msra.mxu0 0.0
    %482 = vmatprep.mubr.f32.mxu0 0.0
    %483 = vmatmul.mubr.f32.gmra.mrb[0].mxu0 %v416
    %v484 = vpop.f32.mrb[0].mxu0
    %v485 = vadd.f32 %v414, %v484
    %v486 = vpop.f32.mrb[0].mxu0
    %487 = vdwg.mxu0
    %488 = vst [vmem:[#allocation3] sm:$0x1] %v485
    // Predicated region
    $region38: #{tpu_custom_call.1} parent=1 // pred_check
      _
    $region39: #{tpu_custom_call.1} parent=1 // pred_check_branch
      %490 = sbr.rel (0) target = $region41
    $region40: #{tpu_custom_call.1} parent=1 // pred_region
      %s492 = ssub.s32 16, 16
      %493 = vsyncadd [#allocation4], %s492
      %s495 = sshll.u32 [#allocation3], 4
      %s496 = int_to_ptr.vmem [resolvable:$true] %s495
      %498 = dma.vmem_to_hbm [thread:$0]  %s496, 16, %s9, [#allocation4]
    $region41: #{tpu_custom_call.1} parent=1 // pred_fallthru
      _
    // Predicated region
    $region42: #{tpu_custom_call.1} parent=1 // pred_check
      _
    $region43: #{tpu_custom_call.1} parent=1 // pred_check_branch
      %500 = sbr.rel (0) target = $region45
    $region44: #{tpu_custom_call.1} parent=1 // pred_region
      %501 = dma.done [#allocation4], 16
    $region45: #{tpu_custom_call.1} parent=1 // pred_fallthru
      _
    %502 = vsyncpa [#allocation4], 1

</llo_original>
